<compile_context>
chip_gen: v7x
topology: tpu7x:2x2x1
jax: 0.10.0
libtpu: 0.0.40
codegen_flags: <defaults>
</compile_context>

<pallas_src>
import functools

import jax
import jax.numpy as jnp
from jax.experimental import pallas as pl
from jax.experimental.pallas import tpu as pltpu


def _round_up(x, m):
    return ((x + m - 1) // m) * m


def _vmem_capacity_bytes():
    """Physical VMEM per TensorCore (128 MiB v5e/v6e, 64 MiB v7x); safe fallback."""
    try:
        info = pltpu.get_tpu_info()
        cap = getattr(info, "vmem_capacity_bytes", None)
        if cap:
            return int(cap)
    except Exception:
        pass
    return 64 * 1024 * 1024  # conservative (v7x per-TC VMEM)


_SQRT_HALF = 0.7071067811865476


def _erf_approx(z):
    # Abramowitz & Stegun 7.1.26 rational approximation, |abs err| <= 1.5e-7.
    # Uses only Mosaic-supported elementwise ops (exp goes to the EUP slot).
    a1, a2, a3, a4, a5 = (0.254829592, -0.284496736, 1.421413741,
                          -1.453152027, 1.061405429)
    p = 0.3275911
    az = jnp.abs(z)
    t = 1.0 / (1.0 + p * az)
    poly = t * (a1 + t * (a2 + t * (a3 + t * (a4 + t * a5))))
    pos = 1.0 - poly * jnp.exp(-az * az)
    return jnp.where(z >= 0, pos, -pos)


def _gelu_exact(h):
    # Exact erf-based GELU (matches torch.nn.GELU(approximate='none') to ~1e-7).
    return 0.5 * h * (1.0 + _erf_approx(h * jnp.float32(_SQRT_HALF)))


# ---------------------------------------------------------------------------
# Kernel A: weights resident in VMEM, 1-D grid over token tiles.
# ---------------------------------------------------------------------------
def ffn_resident_kernel(x_ref, w1_ref, b1_ref, w2_ref, b2_ref, o_ref):
    # x: (TM, H) bf16   w1: (H, F) bf16   b1: (1, F) f32
    # w2: (F, H) bf16   b2: (1, H) f32    o:  (TM, H)
    h = jnp.dot(x_ref[...], w1_ref[...], preferred_element_type=jnp.float32)
    h = _gelu_exact(h + b1_ref[...])
    # TODO(synk): dropout omitted (module evaluated in eval mode => identity).
    out = jnp.dot(h.astype(w2_ref.dtype), w2_ref[...],
                  preferred_element_type=jnp.float32)
    o_ref[...] = (out + b2_ref[...]).astype(o_ref.dtype)


# ---------------------------------------------------------------------------
# Kernel B: F-streamed, 2-D grid (token tiles x F chunks), f32 accumulator.
# ---------------------------------------------------------------------------
def ffn_streamed_kernel(x_ref, w1_ref, b1_ref, w2_ref, b2_ref, o_ref, acc_ref):
    f = pl.program_id(1)

    @pl.when(f == 0)
    def _():
        acc_ref[...] = jnp.zeros_like(acc_ref)

    h = jnp.dot(x_ref[...], w1_ref[...], preferred_element_type=jnp.float32)
    h = _gelu_exact(h + b1_ref[...])
    # TODO(synk): dropout omitted (module evaluated in eval mode => identity).
    acc_ref[...] += jnp.dot(h.astype(w2_ref.dtype), w2_ref[...],
                            preferred_element_type=jnp.float32)

    @pl.when(f == pl.num_programs(1) - 1)
    def _():
        o_ref[...] = (acc_ref[...] + b2_ref[...]).astype(o_ref.dtype)


# ---------------------------------------------------------------------------
# VMEM footprint estimates (double-buffered BlockSpec inputs + f32 temporaries).
# ---------------------------------------------------------------------------
def _resident_vmem_bytes(tm, H, F, itemsize):
    return (2 * tm * H * itemsize          # x tiles (double-buffered)
            + 2 * tm * H * itemsize        # out tiles (double-buffered)
            + 2 * 2 * H * F * itemsize     # w1 + w2 (buffer pair each)
            + 2 * (F + H) * 4              # biases (f32)
            + tm * F * 4                   # GELU intermediate (f32)
            + tm * H * 4)                  # fc2 f32 result before cast


def _streamed_vmem_bytes(tm, tf, H, itemsize):
    return (2 * tm * H * itemsize          # x tiles
            + 2 * tm * H * itemsize        # out tiles
            + 2 * 2 * H * tf * itemsize    # w1/w2 chunks (double-buffered)
            + 2 * (tf + H) * 4             # bias chunks (f32)
            + tm * tf * 4                  # GELU intermediate (f32)
            + tm * H * 4)                  # f32 accumulator scratch


_TM_CANDIDATES = (1024, 512, 256, 128, 64, 32, 16, 8)
_TF_CANDIDATES = (512, 256, 128)


@functools.partial(jax.jit, static_argnames=("compute_dtype",))
def convolution_ffn(x, w1, b1, w2, b2, *, compute_dtype=jnp.bfloat16):
    """ConvolutionFFN forward: x [batch, seq, hidden] -> [batch, seq, hidden]."""
    B, S, H = x.shape
    F = w1.shape[1]
    T = B * S

    cdtype = jnp.dtype(compute_dtype)
    itemsize = cdtype.itemsize
    row_align = 16 if itemsize == 2 else 8   # bf16 packs 16 rows per sublane group

    x2d = x.reshape(T, H).astype(cdtype)
    w1c = w1.astype(cdtype)
    w2c = w2.astype(cdtype)
    b1c = b1.reshape(1, F).astype(jnp.float32)
    b2c = b2.reshape(1, H).astype(jnp.float32)

    vmem_cap = _vmem_capacity_bytes()
    vmem_budget = int(vmem_cap * 0.75)       # headroom for compiler-internal scratch
    T_round = _round_up(T, row_align)

    # ---------------- fast path: weights resident in VMEM ----------------
    tm_resident = None
    for cand in _TM_CANDIDATES:
        tm = _round_up(min(cand, T_round), row_align)
        if _resident_vmem_bytes(tm, H, F, itemsize) <= vmem_budget:
            tm_resident = tm
            break

    if tm_resident is not None:
        TM = tm_resident
        T_pad = _round_up(T, TM)
        if T_pad != T:
            x2d = jnp.pad(x2d, ((0, T_pad - T), (0, 0)))
        grid = (T_pad // TM,)
        # NOTE(v7x): the single "parallel" token axis is sharded across the
        # 2 TensorCores; weights are duplicated in each core's VMEM (fine at 64 MiB).
        est = _resident_vmem_bytes(TM, H, F, itemsize)
        vmem_limit = int(min(vmem_cap * 0.9, max(est * 1.25, 32 * 1024 * 1024)))

        out2d = pl.pallas_call(
            ffn_resident_kernel,
            out_shape=jax.ShapeDtypeStruct((T_pad, H), x.dtype),
            grid_spec=pltpu.PrefetchScalarGridSpec(
                num_scalar_prefetch=0,
                grid=grid,
                in_specs=[
                    pl.BlockSpec((TM, H), lambda i: (i, 0)),  # x tile
                    pl.BlockSpec((H, F), lambda i: (0, 0)),   # w1 (resident)
                    pl.BlockSpec((1, F), lambda i: (0, 0)),   # b1 (resident)
                    pl.BlockSpec((F, H), lambda i: (0, 0)),   # w2 (resident)
                    pl.BlockSpec((1, H), lambda i: (0, 0)),   # b2 (resident)
                ],
                out_specs=pl.BlockSpec((TM, H), lambda i: (i, 0)),
            ),
            compiler_params=pltpu.CompilerParams(
                dimension_semantics=("parallel",),
                vmem_limit_bytes=vmem_limit,
            ),
        )(x2d, w1c, b1c, w2c, b2c)
        return out2d[:T].reshape(B, S, H)

    # ---------------- fallback: stream w1/w2 in F chunks ----------------
    TM, TF = None, None
    for cand in _TM_CANDIDATES:             # prefer large TM (weight-stream intensity)
        tm = _round_up(min(cand, T_round), row_align)
        for tf in _TF_CANDIDATES:
            if _streamed_vmem_bytes(tm, tf, H, itemsize) <= vmem_budget:
                TM, TF = tm, tf
                break
        if TM is not None:
            break
    if TM is None:                          # last resort; let the compiler try
        TM, TF = _round_up(min(row_align, T_round), row_align), 128

    T_pad = _round_up(T, TM)
    if T_pad != T:
        x2d = jnp.pad(x2d, ((0, T_pad - T), (0, 0)))
    F_pad = _round_up(F, TF)
    if F_pad != F:
        # Zero-padded fc1 columns / fc2 rows contribute exactly zero to the output.
        w1c = jnp.pad(w1c, ((0, 0), (0, F_pad - F)))
        b1c = jnp.pad(b1c, ((0, 0), (0, F_pad - F)))
        w2c = jnp.pad(w2c, ((0, F_pad - F), (0, 0)))

    grid = (T_pad // TM, F_pad // TF)
    est = _streamed_vmem_bytes(TM, TF, H, itemsize)
    vmem_limit = int(min(vmem_cap * 0.9, max(est * 1.25, 32 * 1024 * 1024)))

    out2d = pl.pallas_call(
        ffn_streamed_kernel,
        out_shape=jax.ShapeDtypeStruct((T_pad, H), x.dtype),
        grid_spec=pltpu.PrefetchScalarGridSpec(
            num_scalar_prefetch=0,
            grid=grid,
            in_specs=[
                pl.BlockSpec((TM, H), lambda i, f: (i, 0)),   # x tile (resident over f)
                pl.BlockSpec((H, TF), lambda i, f: (0, f)),   # w1 chunk
                pl.BlockSpec((1, TF), lambda i, f: (0, f)),   # b1 chunk
                pl.BlockSpec((TF, H), lambda i, f: (f, 0)),   # w2 chunk
                pl.BlockSpec((1, H), lambda i, f: (0, 0)),    # b2
            ],
            out_specs=pl.BlockSpec((TM, H), lambda i, f: (i, 0)),
            scratch_shapes=[pltpu.VMEM((TM, H), jnp.float32)],
        ),
        compiler_params=pltpu.CompilerParams(
            dimension_semantics=("parallel", "arbitrary"),
            vmem_limit_bytes=vmem_limit,
        ),
    )(x2d, w1c, b1c, w2c, b2c)
    return out2d[:T].reshape(B, S, H)


def reference_ffn(x, w1, b1, w2, b2, compute_dtype=jnp.bfloat16):
    """Pure-JAX reference with the same bf16 operand rounding as the kernel."""
    f32 = jnp.float32
    xc = x.astype(compute_dtype).astype(f32)
    w1c = w1.astype(compute_dtype).astype(f32)
    w2c = w2.astype(compute_dtype).astype(f32)
    h = jnp.einsum("bsh,hf->bsf", xc, w1c, preferred_element_type=f32)
    h = h + b1.reshape(-1).astype(f32)
    h = 0.5 * h * (1.0 + jax.lax.erf(h * jnp.float32(_SQRT_HALF)))
    h = h.astype(compute_dtype).astype(f32)
    out = jnp.einsum("bsf,fh->bsh", h, w2c, preferred_element_type=f32)
    return (out + b2.reshape(-1).astype(f32)).astype(x.dtype)


if __name__ == "__main__":
    # Small shapes consistent with the module: HIDDEN_SIZE=32, FF_SIZE=64.
    B, S, HIDDEN, FF = 2, 8, 32, 64

    key = jax.random.PRNGKey(0)
    kx, k1, k2, k3, k4 = jax.random.split(key, 5)

    x = jax.random.normal(kx, (B, S, HIDDEN), dtype=jnp.float32)
    # nn.Linear(HIDDEN, FF) / nn.Linear(FF, HIDDEN) weights stored as (in, out).
    w1 = jax.random.normal(k1, (HIDDEN, FF), dtype=jnp.float32) * 0.05
    b1 = jax.random.normal(k2, (FF,), dtype=jnp.float32) * 0.01
    w2 = jax.random.normal(k3, (FF, HIDDEN), dtype=jnp.float32) * 0.05
    b2 = jax.random.normal(k4, (HIDDEN,), dtype=jnp.float32) * 0.01

    out = jax.block_until_ready(convolution_ffn(x, w1, b1, w2, b2))
    ref = reference_ffn(x, w1, b1, w2, b2)

    assert out.shape == (B, S, HIDDEN)
    max_err = float(jnp.max(jnp.abs(out - ref)))
    assert jnp.allclose(out, ref, atol=2e-3, rtol=2e-2), f"mismatch, max_abs_err={max_err}"

    print("KERNEL_OK")
</pallas_src>

<mosaic_0001>
module attributes {stable_mosaic.version = 11 : i64} {
  func.func @ffn_resident_kernel(%arg0: i32, %arg1: memref<16x32xbf16, #tpu.memory_space<vmem>>, %arg2: memref<32x64xbf16, #tpu.memory_space<vmem>>, %arg3: memref<1x64xf32, #tpu.memory_space<vmem>>, %arg4: memref<64x32xbf16, #tpu.memory_space<vmem>>, %arg5: memref<1x32xf32, #tpu.memory_space<vmem>>, %arg6: memref<16x32xf32, #tpu.memory_space<vmem>>) attributes {dimension_semantics = [#tpu.dimension_semantics<parallel>], iteration_bounds = array<i64: 1>, scalar_prefetch = 0 : i64, scratch_operands = 0 : i64, tpu.core_type = #tpu.core_type<tc>, window_params = [{transform_indices = @transform_0, window_bounds = array<i64: 16, 32>}, {pipeline_mode = #tpu.pipeline_mode<synchronous>, transform_indices = @transform_1, window_bounds = array<i64: 32, 64>}, {pipeline_mode = #tpu.pipeline_mode<synchronous>, transform_indices = @transform_2, window_bounds = array<i64: 1, 64>}, {pipeline_mode = #tpu.pipeline_mode<synchronous>, transform_indices = @transform_3, window_bounds = array<i64: 64, 32>}, {pipeline_mode = #tpu.pipeline_mode<synchronous>, transform_indices = @transform_4, window_bounds = array<i64: 1, 32>}, {transform_indices = @transform_5, window_bounds = array<i64: 16, 32>}]} {
    %c0 = arith.constant 0 : index
    %c0_0 = arith.constant 0 : index
    %0 = vector.load %arg1[%c0, %c0_0] : memref<16x32xbf16, #tpu.memory_space<vmem>>, vector<16x32xbf16>
    %c0_1 = arith.constant 0 : index
    %c0_2 = arith.constant 0 : index
    %1 = vector.load %arg2[%c0_1, %c0_2] : memref<32x64xbf16, #tpu.memory_space<vmem>>, vector<32x64xbf16>
    %cst = arith.constant dense<0.000000e+00> : vector<16x64xf32>
    %2 = tpu.matmul %0, %1, %cst {dimension_numbers = #tpu.dot_dimension_numbers<[1], [0], [0], [1], [0, 0, 1, 1], [], []>} : vector<16x32xbf16>, vector<32x64xbf16>, vector<16x64xf32> -> vector<16x64xf32>
    %c0_3 = arith.constant 0 : index
    %c0_4 = arith.constant 0 : index
    %3 = vector.load %arg3[%c0_3, %c0_4] : memref<1x64xf32, #tpu.memory_space<vmem>>, vector<1x64xf32>
    %4 = vector.broadcast %3 : vector<1x64xf32> to vector<16x64xf32>
    %5 = arith.addf %2, %4 : vector<16x64xf32>
    %cst_5 = arith.constant 5.000000e-01 : f32
    %6 = vector.broadcast %cst_5 : f32 to vector<16x64xf32>
    %7 = arith.mulf %6, %5 : vector<16x64xf32>
    %cst_6 = arith.constant 0.707106769 : f32
    %8 = vector.broadcast %cst_6 : f32 to vector<16x64xf32>
    %9 = arith.mulf %5, %8 : vector<16x64xf32>
    %10 = math.absf %9 : vector<16x64xf32>
    %cst_7 = arith.constant 0.327591091 : f32
    %11 = vector.broadcast %cst_7 : f32 to vector<16x64xf32>
    %12 = arith.mulf %11, %10 : vector<16x64xf32>
    %cst_8 = arith.constant 1.000000e+00 : f32
    %13 = vector.broadcast %cst_8 : f32 to vector<16x64xf32>
    %14 = arith.addf %13, %12 : vector<16x64xf32>
    %cst_9 = arith.constant 1.000000e+00 : f32
    %15 = vector.broadcast %cst_9 : f32 to vector<16x64xf32>
    %16 = arith.divf %15, %14 : vector<16x64xf32>
    %cst_10 = arith.constant 1.06140542 : f32
    %17 = vector.broadcast %cst_10 : f32 to vector<16x64xf32>
    %18 = arith.mulf %16, %17 : vector<16x64xf32>
    %cst_11 = arith.constant -1.45315206 : f32
    %19 = vector.broadcast %cst_11 : f32 to vector<16x64xf32>
    %20 = arith.addf %19, %18 : vector<16x64xf32>
    %21 = arith.mulf %16, %20 : vector<16x64xf32>
    %cst_12 = arith.constant 1.42141378 : f32
    %22 = vector.broadcast %cst_12 : f32 to vector<16x64xf32>
    %23 = arith.addf %22, %21 : vector<16x64xf32>
    %24 = arith.mulf %16, %23 : vector<16x64xf32>
    %cst_13 = arith.constant -0.284496725 : f32
    %25 = vector.broadcast %cst_13 : f32 to vector<16x64xf32>
    %26 = arith.addf %25, %24 : vector<16x64xf32>
    %27 = arith.mulf %16, %26 : vector<16x64xf32>
    %cst_14 = arith.constant 0.254829586 : f32
    %28 = vector.broadcast %cst_14 : f32 to vector<16x64xf32>
    %29 = arith.addf %28, %27 : vector<16x64xf32>
    %30 = arith.mulf %16, %29 : vector<16x64xf32>
    %cst_15 = arith.constant 0.000000e+00 : f32
    %31 = vector.broadcast %cst_15 : f32 to vector<16x64xf32>
    %32 = arith.subf %31, %10 : vector<16x64xf32>
    %33 = arith.mulf %32, %10 : vector<16x64xf32>
    %34 = math.exp %33 : vector<16x64xf32>
    %35 = arith.mulf %30, %34 : vector<16x64xf32>
    %cst_16 = arith.constant 1.000000e+00 : f32
    %36 = vector.broadcast %cst_16 : f32 to vector<16x64xf32>
    %37 = arith.subf %36, %35 : vector<16x64xf32>
    %cst_17 = arith.constant 0.000000e+00 : f32
    %38 = vector.broadcast %cst_17 : f32 to vector<16x64xf32>
    %39 = arith.cmpf oge, %9, %38 : vector<16x64xf32>
    %cst_18 = arith.constant 0.000000e+00 : f32
    %40 = vector.broadcast %cst_18 : f32 to vector<16x64xf32>
    %41 = arith.subf %40, %37 : vector<16x64xf32>
    %42 = arith.select %39, %37, %41 : vector<16x64xi1>, vector<16x64xf32>
    %cst_19 = arith.constant 1.000000e+00 : f32
    %43 = vector.broadcast %cst_19 : f32 to vector<16x64xf32>
    %44 = arith.addf %43, %42 : vector<16x64xf32>
    %45 = arith.mulf %7, %44 : vector<16x64xf32>
    %46 = arith.truncf %45 : vector<16x64xf32> to vector<16x64xbf16>
    %c0_20 = arith.constant 0 : index
    %c0_21 = arith.constant 0 : index
    %47 = vector.load %arg4[%c0_20, %c0_21] : memref<64x32xbf16, #tpu.memory_space<vmem>>, vector<64x32xbf16>
    %cst_22 = arith.constant dense<0.000000e+00> : vector<16x32xf32>
    %48 = tpu.matmul %46, %47, %cst_22 {dimension_numbers = #tpu.dot_dimension_numbers<[1], [0], [0], [1], [0, 0, 1, 1], [], []>} : vector<16x64xbf16>, vector<64x32xbf16>, vector<16x32xf32> -> vector<16x32xf32>
    %c0_23 = arith.constant 0 : index
    %c0_24 = arith.constant 0 : index
    %49 = vector.load %arg5[%c0_23, %c0_24] : memref<1x32xf32, #tpu.memory_space<vmem>>, vector<1x32xf32>
    %50 = vector.broadcast %49 : vector<1x32xf32> to vector<16x32xf32>
    %51 = arith.addf %48, %50 : vector<16x32xf32>
    %c0_25 = arith.constant 0 : index
    %c0_26 = arith.constant 0 : index
    %52 = vector.load %arg6[%c0_25, %c0_26] : memref<16x32xf32, #tpu.memory_space<vmem>>, vector<16x32xf32>
    tpu.vector_store %arg6[%c0_25, %c0_26], %51 {strides = array<i32>} : memref<16x32xf32, #tpu.memory_space<vmem>>, vector<16x32xf32>,
    return
  }
  func.func @transform_0(%arg0: i32) -> (i32, i32) {
    %c0_i32 = arith.constant 0 : i32
    %c0_i32_0 = arith.constant 0 : i32
    return %arg0, %c0_i32 : i32, i32
  }
  func.func @transform_1(%arg0: i32) -> (i32, i32) {
    %c0_i32 = arith.constant 0 : i32
    %c0_i32_0 = arith.constant 0 : i32
    %c0_i32_1 = arith.constant 0 : i32
    return %c0_i32, %c0_i32_0 : i32, i32
  }
  func.func @transform_2(%arg0: i32) -> (i32, i32) {
    %c0_i32 = arith.constant 0 : i32
    %c0_i32_0 = arith.constant 0 : i32
    %c0_i32_1 = arith.constant 0 : i32
    return %c0_i32, %c0_i32_0 : i32, i32
  }
  func.func @transform_3(%arg0: i32) -> (i32, i32) {
    %c0_i32 = arith.constant 0 : i32
    %c0_i32_0 = arith.constant 0 : i32
    %c0_i32_1 = arith.constant 0 : i32
    return %c0_i32, %c0_i32_0 : i32, i32
  }
  func.func @transform_4(%arg0: i32) -> (i32, i32) {
    %c0_i32 = arith.constant 0 : i32
    %c0_i32_0 = arith.constant 0 : i32
    %c0_i32_1 = arith.constant 0 : i32
    return %c0_i32, %c0_i32_0 : i32, i32
  }
  func.func @transform_5(%arg0: i32) -> (i32, i32) {
    %c0_i32 = arith.constant 0 : i32
    %c0_i32_0 = arith.constant 0 : i32
    return %arg0, %c0_i32 : i32, i32
  }
}

</mosaic_0001>

<llo_original>
// kernel: convolution_ffn.1
$region0: #{convolution_ffn.1}
  #allocation0 [shape = 'u32[]', space=smem, size = 0x4, offset = 0x4, fixed_abs, tag = 'smem constant byte address 0x4 - core index']
  #allocation1 [shape = 'u32[144,128]{1,0:T(1,128)}', space=vmem, size = 0x12000, scoped, tag = 'internal scratch']
  %s0 = inlined_call_operand.vmem [shape: bf16[16,32], index: 0, kind: input, shape index: {}]
  %s1 = inlined_call_operand.vmem [shape: bf16[32,64], index: 1, kind: input, shape index: {}]
  %s2 = inlined_call_operand.vmem [shape: f32[1,64], index: 2, kind: input, shape index: {}]
  %s3 = inlined_call_operand.vmem [shape: bf16[64,32], index: 3, kind: input, shape index: {}]
  %s4 = inlined_call_operand.vmem [shape: f32[1,32], index: 4, kind: input, shape index: {}]
  %s5 = inlined_call_operand.hbm [shape: f32[16,32], index: 5, kind: output, shape index: {}]
  %s6 = sld [smem:[#allocation0]]
  $region30: #{convolution_ffn.1} parent=0
    _
  %s8 = ssub.s32 1, %s6
  %s9 = scalar_select 0, %s8, %s6
  $region1: #{convolution_ffn.1} parent=0
    #allocation2 [shape = 'u8[8192]{0}', space=vmem, size = 0x2000, scoped, tag = 'output window, operand 0, single buffered']
    #allocation3 [shape = 's32[1]{0}', space=sflag, size = 0x4, scoped, tag = 'scoped memory for convolution_ffn.1']
    %10 = vsyncpa [#allocation3], 0
    // Predicated region
    $region2: #{convolution_ffn.1} parent=1 // pred_check
      _
    $region3: #{convolution_ffn.1} parent=1 // pred_check_branch
      %12 = sbr.rel (0) target = $region5
    $region4: #{convolution_ffn.1} parent=1 // pred_region
      _
    $region5: #{convolution_ffn.1} parent=1 // pred_fallthru
      _
    // Predicated region
    $region6: #{convolution_ffn.1} parent=1 // pred_check
      _
    $region7: #{convolution_ffn.1} parent=1 // pred_check_branch
      %14 = sbr.rel (0) target = $region9
    $region8: #{convolution_ffn.1} parent=1 // pred_region
      _
    $region9: #{convolution_ffn.1} parent=1 // pred_fallthru
      _
    // Predicated region
    $region10: #{convolution_ffn.1} parent=1 // pred_check
      _
    $region11: #{convolution_ffn.1} parent=1 // pred_check_branch
      %16 = sbr.rel (0) target = $region13
    $region12: #{convolution_ffn.1} parent=1 // pred_region
      _
    $region13: #{convolution_ffn.1} parent=1 // pred_fallthru
      _
    // Predicated region
    $region14: #{convolution_ffn.1} parent=1 // pred_check
      _
    $region15: #{convolution_ffn.1} parent=1 // pred_check_branch
      %18 = sbr.rel (0) target = $region17
    $region16: #{convolution_ffn.1} parent=1 // pred_region
      _
    $region17: #{convolution_ffn.1} parent=1 // pred_fallthru
      _
    // Predicated region
    $region18: #{convolution_ffn.1} parent=1 // pred_check
      _
    $region19: #{convolution_ffn.1} parent=1 // pred_check_branch
      %20 = sbr.rel (0) target = $region21
    $region20: #{convolution_ffn.1} parent=1 // pred_region
      _
    $region21: #{convolution_ffn.1} parent=1 // pred_fallthru
      _
    %v22 = vld [vmem:[%s0] sm:$0xf]
    %v23 = vld [vmem:[%s0 + $0x4] sm:$0xf]
    %v24 = vld [vmem:[%s1] sm:$0xf]
    %v25 = vld [vmem:[%s1 + $0x4] sm:$0xf]
    %v26 = vld [vmem:[%s1 + $0x8] sm:$0xf]
    %v27 = vld [vmem:[%s1 + $0xc] sm:$0xf]
    %v28 = vld [vmem:[%s2] sm:$0x1]
    %v30 = vlaneseq
    %v31 = vshrl.u32 %v30, 7
    %v32 = vsub.s32 0, %v31
    %v33 = vrot.slane %v28, %v32
    %v37 = vunpack.c.l.b16 %v22
    %v38 = vunpack.c.l.b16 %v23
    %v39 = vpack.c.b16 %v38, %v37
    %v44 = vunpack.c.l.b16 %v24
    %v45 = vunpack.c.l.b16 %v25
    %v46 = vunpack.c.l.b16 %v26
    %v47 = vunpack.c.l.b16 %v27
    %v48 = vpack.c.b16 %v45, %v44
    %v49 = vpack.c.b16 %v47, %v46
    %vm52 = vcmask 261120
    %v54 = vsel %vm52, %v39, 0
    %56 = vmatprep.subr.bf16.mxu0 0
    %57 = vmatpush1.bf16.msra.mxu0 %v48
    %58 = vmatprep.subr.bf16.mxu0 0
    %59 = vmatpush1.bf16.msra.mxu0 %v49
    %60 = vmatprep.subr.bf16.mxu0 0
    %61 = vmatpush1.bf16.msra.mxu0 0
    %62 = vmatprep.subr.bf16.mxu0 0
    %63 = vmatpush1.bf16.msra.mxu0 0
    %64 = vmatprep.subr.bf16.mxu0 0
    %65 = vmatpush1.bf16.msra.mxu0 0
    %66 = vmatprep.subr.bf16.mxu0 0
    %67 = vmatpush1.bf16.msra.mxu0 0
    %68 = vmatprep.subr.bf16.mxu0 0
    %69 = vmatpush1.bf16.msra.mxu0 0
    %70 = vmatprep.subr.bf16.mxu0 0
    %71 = vmatpush1.bf16.msra.mxu0 0
    %72 = vmatprep.subr.bf16.mxu0 0
    %73 = vmatpush1.bf16.msra.mxu0 0
    %74 = vmatprep.subr.bf16.mxu0 0
    %75 = vmatpush1.bf16.msra.mxu0 0
    %76 = vmatprep.subr.bf16.mxu0 0
    %77 = vmatpush1.bf16.msra.mxu0 0
    %78 = vmatprep.subr.bf16.mxu0 0
    %79 = vmatpush1.bf16.msra.mxu0 0
    %80 = vmatprep.subr.bf16.mxu0 0
    %81 = vmatpush1.bf16.msra.mxu0 0
    %82 = vmatprep.subr.bf16.mxu0 0
    %83 = vmatpush1.bf16.msra.mxu0 0
    %84 = vmatprep.subr.bf16.mxu0 0
    %85 = vmatpush1.bf16.msra.mxu0 0
    %86 = vmatprep.subr.bf16.mxu0 0
    %87 = vmatpush1.bf16.msra.mxu0 0
    %88 = vmatprep.mubr.bf16.mxu0 0
    %89 = vmatmul.mubr.bf16.gmra.mrb[0].mxu0 %v54
    %v90 = vpop.f32.mrb[0].mxu0
    %v91 = vadd.f32 %v33, %v90
    %v92 = vpop.f32.mrb[0].mxu0
    %v93 = vpop.f32.mrb[0].mxu0
    %v94 = vadd.f32 %v33, %v93
    %v95 = vpop.f32.mrb[0].mxu0
    %96 = vdwg.mxu0
    %v97 = vmul.f32 %v91, 0.5
    %v98 = vmul.f32 %v94, 0.5
    %v99 = vmul.f32 %v91, 0.70710677
    %v100 = vmul.f32 %v94, 0.70710677
    %v101 = vand.u32 2147483647, %v99
    %v102 = vand.u32 2147483647, %v100
    %v103 = vmul.f32 %v101, 0.3275911
    %v104 = vmul.f32 %v102, 0.3275911
    %v105 = vadd.f32 %v103, 1.0
    %v106 = vadd.f32 %v104, 1.0
    %v107 = vrcp.pop %v105
    %v108 = vmul.f32 1.0, %v107
    %v109 = vrcp.pop %v106
    %v110 = vmul.f32 1.0, %v109
    %v111 = vmul.f32 %v108, 1.0614054
    %v112 = vmul.f32 %v110, 1.0614054
    %v113 = vadd.f32 %v111, -1.4531521
    %v114 = vadd.f32 %v112, -1.4531521
    %v115 = vmul.f32 %v108, %v113
    %v116 = vmul.f32 %v110, %v114
    %v117 = vadd.f32 %v115, 1.4214138
    %v118 = vadd.f32 %v116, 1.4214138
    %v119 = vmul.f32 %v108, %v117
    %v120 = vmul.f32 %v110, %v118
    %v121 = vadd.f32 %v119, -0.28449672
    %v122 = vadd.f32 %v120, -0.28449672
    %v123 = vmul.f32 %v108, %v121
    %v124 = vmul.f32 %v110, %v122
    %v125 = vadd.f32 %v123, 0.2548296
    %v126 = vadd.f32 %v124, 0.2548296
    %v127 = vmul.f32 %v108, %v125
    %v128 = vmul.f32 %v110, %v126
    %v129 = vsub.f32 0.0, %v101
    %v130 = vsub.f32 0.0, %v102
    %v131 = vmul.f32 %v129, %v101
    %v132 = vmul.f32 %v130, %v102
    %v133 = vmul.f32 %v131, 1.442695
    %v134 = vpow.pop %v133
    %v135 = vmul.f32 %v132, 1.442695
    %v136 = vpow.pop %v135
    %v137 = vmul.f32 %v127, %v134
    %v138 = vmul.f32 %v128, %v136
    %v139 = vsub.f32 1.0, %v137
    %v140 = vsub.f32 1.0, %v138
    %vm141 = vcmp.ge.f32.partialorder %v99, 0.0
    %vm142 = vcmp.ge.f32.partialorder %v100, 0.0
    %v143 = vsub.f32 0.0, %v139
    %v144 = vsub.f32 0.0, %v140
    %v145 = vsel %vm141, %v139, %v143
    %v146 = vsel %vm142, %v140, %v144
    %v147 = vadd.f32 %v145, 1.0
    %v148 = vadd.f32 %v146, 1.0
    %v149 = vmul.f32 %v97, %v147
    %v150 = vmul.f32 %v98, %v148
    %v151 = vpack.c.bf16 %v150, %v149
    %v152 = vld [vmem:[%s3] sm:$0xf]
    %v153 = vld [vmem:[%s3 + $0x4] sm:$0xf]
    %v154 = vld [vmem:[%s3 + $0x8] sm:$0xf]
    %v155 = vld [vmem:[%s3 + $0xc] sm:$0xf]
    %v156 = vld [vmem:[%s3 + $0x10] sm:$0xf]
    %v157 = vld [vmem:[%s3 + $0x14] sm:$0xf]
    %v158 = vld [vmem:[%s3 + $0x18] sm:$0xf]
    %v159 = vld [vmem:[%s3 + $0x1c] sm:$0xf]
    %v160 = vld [vmem:[%s4] sm:$0x1]
    %v162 = vlaneseq
    %v163 = vshrl.u32 %v162, 7
    %v164 = vsub.s32 0, %v163
    %v165 = vrot.slane %v160, %v164
    %v175 = vunpack.c.l.b16 %v152
    %v176 = vunpack.c.l.b16 %v153
    %v177 = vunpack.c.l.b16 %v154
    %v178 = vunpack.c.l.b16 %v155
    %v179 = vunpack.c.l.b16 %v156
    %v180 = vunpack.c.l.b16 %v157
    %v181 = vunpack.c.l.b16 %v158
    %v182 = vunpack.c.l.b16 %v159
    %v183 = vpack.c.b16 %v176, %v175
    %v184 = vpack.c.b16 %v178, %v177
    %v185 = vpack.c.b16 %v180, %v179
    %v186 = vpack.c.b16 %v182, %v181
    %vm191 = vcmask 523264
    %v193 = vsel %vm191, %v151, 0
    %195 = vmatprep.subr.bf16.mxu0 0
    %196 = vmatpush1.bf16.msra.mxu0 %v183
    %197 = vmatprep.subr.bf16.mxu0 0
    %198 = vmatpush1.bf16.msra.mxu0 %v184
    %199 = vmatprep.subr.bf16.mxu0 0
    %200 = vmatpush1.bf16.msra.mxu0 %v185
    %201 = vmatprep.subr.bf16.mxu0 0
    %202 = vmatpush1.bf16.msra.mxu0 %v186
    %203 = vmatprep.subr.bf16.mxu0 0
    %204 = vmatpush1.bf16.msra.mxu0 0
    %205 = vmatprep.subr.bf16.mxu0 0
    %206 = vmatpush1.bf16.msra.mxu0 0
    %207 = vmatprep.subr.bf16.mxu0 0
    %208 = vmatpush1.bf16.msra.mxu0 0
    %209 = vmatprep.subr.bf16.mxu0 0
    %210 = vmatpush1.bf16.msra.mxu0 0
    %211 = vmatprep.subr.bf16.mxu0 0
    %212 = vmatpush1.bf16.msra.mxu0 0
    %213 = vmatprep.subr.bf16.mxu0 0
    %214 = vmatpush1.bf16.msra.mxu0 0
    %215 = vmatprep.subr.bf16.mxu0 0
    %216 = vmatpush1.bf16.msra.mxu0 0
    %217 = vmatprep.subr.bf16.mxu0 0
    %218 = vmatpush1.bf16.msra.mxu0 0
    %219 = vmatprep.subr.bf16.mxu0 0
    %220 = vmatpush1.bf16.msra.mxu0 0
    %221 = vmatprep.subr.bf16.mxu0 0
    %222 = vmatpush1.bf16.msra.mxu0 0
    %223 = vmatprep.subr.bf16.mxu0 0
    %224 = vmatpush1.bf16.msra.mxu0 0
    %225 = vmatprep.subr.bf16.mxu0 0
    %226 = vmatpush1.bf16.msra.mxu0 0
    %227 = vmatprep.mubr.bf16.mxu0 0
    %228 = vmatmul.mubr.bf16.gmra.mrb[0].mxu0 %v193
    %v229 = vpop.f32.mrb[0].mxu0
    %v230 = vadd.f32 %v165, %v229
    %v231 = vpop.f32.mrb[0].mxu0
    %v232 = vpop.f32.mrb[0].mxu0
    %v233 = vadd.f32 %v165, %v232
    %v234 = vpop.f32.mrb[0].mxu0
    %235 = vdwg.mxu0
    %236 = vst.msk [vmem:[#allocation2] sm:$0xff] %vm52, %v230
    %237 = vst.msk [vmem:[#allocation2 + $0x8] sm:$0xff] %vm52, %v233
    // Predicated region
    $region22: #{convolution_ffn.1} parent=1 // pred_check
      _
    $region23: #{convolution_ffn.1} parent=1 // pred_check_branch
      %239 = sbr.rel (0) target = $region25
    $region24: #{convolution_ffn.1} parent=1 // pred_region
      %s241 = ssub.s32 256, 256
      %242 = vsyncadd [#allocation3], %s241
      %s243 = sshll.u32 [#allocation2], 4
      %s244 = int_to_ptr.vmem [resolvable:$true] %s243
      %249 = dma.vmem_to_hbm [thread:$0]  %s244, 256, %s5, [#allocation3], 128, 128, 8
    $region25: #{convolution_ffn.1} parent=1 // pred_fallthru
      _
    // Predicated region
    $region26: #{convolution_ffn.1} parent=1 // pred_check
      _
    $region27: #{convolution_ffn.1} parent=1 // pred_check_branch
      %251 = sbr.rel (0) target = $region29
    $region28: #{convolution_ffn.1} parent=1 // pred_region
      %252 = dma.done [#allocation3], 256
    $region29: #{convolution_ffn.1} parent=1 // pred_fallthru
      _
    %253 = vsyncpa [#allocation3], 1

</llo_original>
